<compile_context>
chip_gen: v7x
topology: tpu7x:2x2x1
jax: 0.10.0
libtpu: 0.0.40
codegen_flags: <defaults>
</compile_context>

<pallas_src>
import functools

import jax
import jax.numpy as jnp
from jax.experimental import pallas as pl
from jax.experimental.pallas import tpu as pltpu

EPS = 1e-6
LANES = 128
SUBLANES = 8
MAX_TILE_ROWS = 2048      # 2048 * 128 * 4B = 1 MiB per f32 input block


def _round_up(x, m):
    return ((x + m - 1) // m) * m


def _rmsle_kernel(pred_ref, act_ref, out_ref, acc_ref, *,
                  eps, tile_rows, valid_rows_last, n_steps):
    step = pl.program_id(0)

    @pl.when(step == 0)
    def _init():
        acc_ref[...] = jnp.zeros_like(acc_ref)

    # Cast to f32 inside the kernel (keeps HBM traffic at the native width).
    p = jnp.maximum(pred_ref[...].astype(jnp.float32), jnp.float32(eps))
    a = jnp.maximum(act_ref[...].astype(jnp.float32), jnp.float32(eps))
    d = jnp.log1p(p) - jnp.log1p(a)
    sq = d * d

    def _accumulate(x):
        # (tile_rows, 128) -> (tile_rows//8, 8, 128); sum over the leading axis
        # is a layout-preserving chain of vreg adds into a (8,128) accumulator.
        acc_ref[...] += jnp.sum(x.reshape(-1, SUBLANES, LANES), axis=0)

    if valid_rows_last == tile_rows:
        # Every block is full: no masking anywhere (static fast path).
        _accumulate(sq)
    else:
        @pl.when(step != n_steps - 1)
        def _full_block():
            _accumulate(sq)

        @pl.when(step == n_steps - 1)
        def _ragged_block():
            # Rows beyond the array in the partial last block hold undefined
            # data; zero their contribution before accumulating.
            row = jax.lax.broadcasted_iota(jnp.int32, (tile_rows, LANES), 0)
            _accumulate(jnp.where(row < valid_rows_last, sq, 0.0))

    @pl.when(step == n_steps - 1)
    def _finalize():
        out_ref[0, 0] = jnp.sum(acc_ref[...])   # single small XLU reduce


def rmsle_loss(pred, actual, eps=EPS):
    """RMSLE loss via a Pallas streaming reduction. Any shape, any float dtype."""
    assert pred.shape == actual.shape
    n_total = pred.size

    p_flat = pred.reshape(-1)
    a_flat = actual.reshape(-1)

    # Lane-align only: pad to the next multiple of 128 elements, and only when
    # the size is actually ragged.  Padded zeros clamp to eps on both operands,
    # so their log-diff is exactly 0 and the mean (divided by n_total) is exact.
    rows = -(-n_total // LANES)
    pad = rows * LANES - n_total
    if pad:
        p_flat = jnp.pad(p_flat, (0, pad))
        a_flat = jnp.pad(a_flat, (0, pad))
    p2 = p_flat.reshape(rows, LANES)
    a2 = a_flat.reshape(rows, LANES)

    tile_rows = min(MAX_TILE_ROWS, _round_up(rows, SUBLANES))
    n_steps = -(-rows // tile_rows)
    valid_rows_last = rows - (n_steps - 1) * tile_rows

    partial = pl.pallas_call(
        functools.partial(_rmsle_kernel, eps=eps, tile_rows=tile_rows,
                          valid_rows_last=valid_rows_last, n_steps=n_steps),
        out_shape=jax.ShapeDtypeStruct((1, 1), jnp.float32),
        grid_spec=pltpu.PrefetchScalarGridSpec(
            num_scalar_prefetch=0,
            grid=(n_steps,),
            in_specs=[
                pl.BlockSpec((tile_rows, LANES), lambda i: (i, 0)),
                pl.BlockSpec((tile_rows, LANES), lambda i: (i, 0)),
            ],
            out_specs=pl.BlockSpec((1, 1), lambda i: (0, 0),
                                   memory_space=pltpu.SMEM),
            scratch_shapes=[pltpu.VMEM((SUBLANES, LANES), jnp.float32)],
        ),
        compiler_params=pltpu.CompilerParams(
            dimension_semantics=("arbitrary",)),
    )(p2, a2)

    return jnp.sqrt(partial[0, 0] / jnp.float32(n_total))


def rmsle_ref(pred, actual, eps=EPS):
    p = jnp.maximum(pred.astype(jnp.float32), eps)
    a = jnp.maximum(actual.astype(jnp.float32), eps)
    return jnp.sqrt(jnp.mean((jnp.log1p(p) - jnp.log1p(a)) ** 2))


if __name__ == "__main__":
    key = jax.random.PRNGKey(0)
    k1, k2, k3, k4 = jax.random.split(key, 4)

    rmsle = jax.jit(rmsle_loss)

    # e.g. 32 forecast rows x 128 targets (sales-like non-negative values)
    pred = jax.random.uniform(k1, (32, 128), jnp.float32, minval=0.0, maxval=100.0)
    actual = jax.random.uniform(k2, (32, 128), jnp.float32, minval=0.0, maxval=100.0)
    loss = jax.block_until_ready(rmsle(pred, actual))
    ref = rmsle_ref(pred, actual)
    assert jnp.allclose(loss, ref, rtol=1e-5, atol=1e-6), (loss, ref)

    # ragged shape + bf16 inputs: exercises the masked-tail path and in-kernel cast
    pred2 = jax.random.uniform(k3, (7, 50), jnp.float32, 0.0, 10.0).astype(jnp.bfloat16)
    act2 = jax.random.uniform(k4, (7, 50), jnp.float32, 0.0, 10.0).astype(jnp.bfloat16)
    loss2 = jax.block_until_ready(rmsle(pred2, act2))
    ref2 = rmsle_ref(pred2, act2)
    assert jnp.allclose(loss2, ref2, rtol=1e-4, atol=1e-5), (loss2, ref2)

    print("KERNEL_OK")
</pallas_src>

<mosaic_0001>
module attributes {stable_mosaic.version = 11 : i64} {
  func.func @_rmsle_kernel(%arg0: i32, %arg1: memref<32x128xf32, #tpu.memory_space<vmem>>, %arg2: memref<32x128xf32, #tpu.memory_space<vmem>>, %arg3: memref<1x1xf32, #tpu.memory_space<smem>>, %arg4: memref<8x128xf32, #tpu.memory_space<vmem>>) attributes {dimension_semantics = [#tpu.dimension_semantics<arbitrary>], iteration_bounds = array<i64: 1>, scalar_prefetch = 0 : i64, scratch_operands = 1 : i64, tpu.core_type = #tpu.core_type<tc>, window_params = [{transform_indices = @transform_0, window_bounds = array<i64: 32, 128>}, {transform_indices = @transform_1, window_bounds = array<i64: 32, 128>}, {transform_indices = @transform_2, window_bounds = array<i64: 1, 1>}]} {
    %c0_i32 = arith.constant 0 : i32
    %0 = arith.cmpi eq, %arg0, %c0_i32 : i32
    %1 = arith.extui %0 : i1 to i32
    %c0_i32_0 = arith.constant 0 : i32
    %2 = arith.cmpi ne, %1, %c0_i32_0 : i32
    scf.if %2 {
      %cst_12 = arith.constant 0.000000e+00 : f32
      %21 = vector.broadcast %cst_12 : f32 to vector<8x128xf32>
      %c0_13 = arith.constant 0 : index
      %c0_14 = arith.constant 0 : index
      %22 = vector.load %arg4[%c0_13, %c0_14] : memref<8x128xf32, #tpu.memory_space<vmem>>, vector<8x128xf32>
      tpu.vector_store %arg4[%c0_13, %c0_14], %21 {strides = array<i32>} : memref<8x128xf32, #tpu.memory_space<vmem>>, vector<8x128xf32>,
    } else {
    }
    %c0 = arith.constant 0 : index
    %c0_1 = arith.constant 0 : index
    %3 = vector.load %arg1[%c0, %c0_1] : memref<32x128xf32, #tpu.memory_space<vmem>>, vector<32x128xf32>
    %cst = arith.constant 9.99999997E-7 : f32
    %4 = vector.broadcast %cst : f32 to vector<32x128xf32>
    %5 = arith.maximumf %3, %4 : vector<32x128xf32>
    %c0_2 = arith.constant 0 : index
    %c0_3 = arith.constant 0 : index
    %6 = vector.load %arg2[%c0_2, %c0_3] : memref<32x128xf32, #tpu.memory_space<vmem>>, vector<32x128xf32>
    %cst_4 = arith.constant 9.99999997E-7 : f32
    %7 = vector.broadcast %cst_4 : f32 to vector<32x128xf32>
    %8 = arith.maximumf %6, %7 : vector<32x128xf32>
    %9 = math.log1p %5 : vector<32x128xf32>
    %10 = math.log1p %8 : vector<32x128xf32>
    %11 = arith.subf %9, %10 : vector<32x128xf32>
    %12 = arith.mulf %11, %11 : vector<32x128xf32>
    %c0_5 = arith.constant 0 : index
    %c0_6 = arith.constant 0 : index
    %13 = vector.load %arg4[%c0_5, %c0_6] : memref<8x128xf32, #tpu.memory_space<vmem>>, vector<8x128xf32>
    %14 = vector.shape_cast %12 : vector<32x128xf32> to vector<4x8x128xf32>
    %cst_7 = arith.constant dense<0.000000e+00> : vector<8x128xf32>
    %15 = vector.multi_reduction <add>, %14, %cst_7 [0] : vector<4x8x128xf32> to vector<8x128xf32>
    %16 = arith.addf %13, %15 : vector<8x128xf32>
    %c0_8 = arith.constant 0 : index
    %c0_9 = arith.constant 0 : index
    %17 = vector.load %arg4[%c0_8, %c0_9] : memref<8x128xf32, #tpu.memory_space<vmem>>, vector<8x128xf32>
    tpu.vector_store %arg4[%c0_8, %c0_9], %16 {strides = array<i32>} : memref<8x128xf32, #tpu.memory_space<vmem>>, vector<8x128xf32>,
    %c0_i32_10 = arith.constant 0 : i32
    %18 = arith.cmpi eq, %arg0, %c0_i32_10 : i32
    %19 = arith.extui %18 : i1 to i32
    %c0_i32_11 = arith.constant 0 : i32
    %20 = arith.cmpi ne, %19, %c0_i32_11 : i32
    scf.if %20 {
      %c0_12 = arith.constant 0 : index
      %c0_13 = arith.constant 0 : index
      %21 = vector.load %arg4[%c0_12, %c0_13] : memref<8x128xf32, #tpu.memory_space<vmem>>, vector<8x128xf32>
      %22 = vector.shape_cast %21 : vector<8x128xf32> to vector<1x8x128xf32>
      %cst_14 = arith.constant dense<0.000000e+00> : vector<1xf32>
      %23 = vector.multi_reduction <add>, %22, %cst_14 [1, 2] : vector<1x8x128xf32> to vector<1xf32>
      %24 = vector.shape_cast %23 : vector<1xf32> to vector<1x1x1xf32>
      %25 = vector.extract %24[0, 0, 0] : f32 from vector<1x1x1xf32>
      %c0_15 = arith.constant 0 : index
      %c0_16 = arith.constant 0 : index
      %26 = memref.load %arg3[%c0_15, %c0_16] : memref<1x1xf32, #tpu.memory_space<smem>>
      memref.store %25, %arg3[%c0_15, %c0_16] : memref<1x1xf32, #tpu.memory_space<smem>>
    } else {
    }
    return
  }
  func.func @transform_0(%arg0: i32) -> (i32, i32) {
    %c0_i32 = arith.constant 0 : i32
    %c0_i32_0 = arith.constant 0 : i32
    return %arg0, %c0_i32 : i32, i32
  }
  func.func @transform_1(%arg0: i32) -> (i32, i32) {
    %c0_i32 = arith.constant 0 : i32
    %c0_i32_0 = arith.constant 0 : i32
    return %arg0, %c0_i32 : i32, i32
  }
  func.func @transform_2(%arg0: i32) -> (i32, i32) {
    %c0_i32 = arith.constant 0 : i32
    %c0_i32_0 = arith.constant 0 : i32
    %c0_i32_1 = arith.constant 0 : i32
    return %c0_i32, %c0_i32_0 : i32, i32
  }
}

</mosaic_0001>

<llo_original>
// kernel: rmsle_loss.1
$region0: #{rmsle_loss.1}
  #allocation0 [shape = 'u32[]', space=smem, size = 0x4, offset = 0x4, fixed_abs, tag = 'smem constant byte address 0x4 - core index']
  #allocation1 [shape = 'u32[144,128]{1,0:T(1,128)}', space=vmem, size = 0x12000, scoped, tag = 'internal scratch']
  #allocation2 [shape = 'f32[8,128]{1,0:T(8,128)}', space=vmem, size = 0x1000, scoped, tag = 'scratch operand']
  %s0 = inlined_call_operand.hbm [shape: f32[32,128], index: 0, kind: input, shape index: {}]
  %s1 = inlined_call_operand.hbm [shape: f32[32,128], index: 1, kind: input, shape index: {}]
  %s2 = inlined_call_operand.hbm [shape: f32[1,1], index: 2, kind: output, shape index: {}]
  %s3 = sld [smem:[#allocation0]]
  $region34: #{rmsle_loss.1} parent=0
    _
  %s5 = ssub.s32 1, %s3
  %s6 = scalar_select 0, %s5, %s3
  $region1: #{rmsle_loss.1} parent=0
    #allocation3 [shape = 'u8[16384]{0}', space=vmem, size = 0x4000, scoped, tag = 'input window, operand 0, single buffered']
    #allocation4 [shape = 's32[1]{0}', space=sflag, size = 0x4, scoped, tag = 'scoped memory for rmsle_loss.1']
    #allocation5 [shape = 's32[1]{0}', space=sflag, size = 0x4, scoped, tag = 'scoped memory for rmsle_loss.1']
    #allocation6 [shape = 'u8[16384]{0}', space=vmem, size = 0x4000, scoped, tag = 'input window, operand 1, single buffered']
    #allocation7 [shape = 's32[1]{0}', space=sflag, size = 0x4, scoped, tag = 'scoped memory for rmsle_loss.1']
    #allocation8 [shape = 'u8[512]{0}', space=smem, size = 0x200, scoped, tag = 'output window, operand 0, single buffered']
    %7 = vsyncpa [#allocation4], 0
    %8 = vsyncpa [#allocation7], 0
    %9 = vsyncpa [#allocation5], 0
    // Predicated region
    $region2: #{rmsle_loss.1} parent=1 // pred_check
      _
    $region3: #{rmsle_loss.1} parent=1 // pred_check_branch
      %11 = sbr.rel (0) target = $region5
    $region4: #{rmsle_loss.1} parent=1 // pred_region
      %s13 = ssub.s32 512, 512
      %14 = vsyncadd [#allocation4], %s13
      %s15 = sshll.u32 [#allocation3], 4
      %s16 = int_to_ptr.vmem [resolvable:$true] %s15
      %21 = dma.hbm_to_vmem [thread:$0]  %s0, 512, %s16, [#allocation4], 128, 128, 8
    $region5: #{rmsle_loss.1} parent=1 // pred_fallthru
      _
    // Predicated region
    $region6: #{rmsle_loss.1} parent=1 // pred_check
      _
    $region7: #{rmsle_loss.1} parent=1 // pred_check_branch
      %23 = sbr.rel (0) target = $region9
    $region8: #{rmsle_loss.1} parent=1 // pred_region
      %s25 = ssub.s32 512, 512
      %26 = vsyncadd [#allocation7], %s25
      %s27 = sshll.u32 [#allocation6], 4
      %s28 = int_to_ptr.vmem [resolvable:$true] %s27
      %33 = dma.hbm_to_vmem [thread:$0]  %s1, 512, %s28, [#allocation7], 128, 128, 8
    $region9: #{rmsle_loss.1} parent=1 // pred_fallthru
      _
    // Predicated region
    $region10: #{rmsle_loss.1} parent=1 // pred_check
      _
    $region11: #{rmsle_loss.1} parent=1 // pred_check_branch
      %35 = sbr.rel (0) target = $region13
    $region12: #{rmsle_loss.1} parent=1 // pred_region
      %36 = dma.done [#allocation4], 512
    $region13: #{rmsle_loss.1} parent=1 // pred_fallthru
      _
    // Predicated region
    $region14: #{rmsle_loss.1} parent=1 // pred_check
      _
    $region15: #{rmsle_loss.1} parent=1 // pred_check_branch
      %38 = sbr.rel (0) target = $region17
    $region16: #{rmsle_loss.1} parent=1 // pred_region
      %39 = dma.done [#allocation7], 512
    $region17: #{rmsle_loss.1} parent=1 // pred_fallthru
      _
    %p40 = scmp.eq.s32.totalorder 0, 0
    // Predicated region
    $region18: #{rmsle_loss.1} parent=1 // pred_check
      %p41 = pneg %p40
    $region19: #{rmsle_loss.1} parent=1 // pred_check_branch
      %43 = sbr.rel (%p41) target = $region21
    $region20: #{rmsle_loss.1} parent=1 // pred_region
      %44 = vst [vmem:[#allocation2] sm:$0xff] 0.0
    $region21: #{rmsle_loss.1} parent=1 // pred_fallthru
      _
    %v45 = vld [vmem:[#allocation3] sm:$0xff]
    %v46 = vld [vmem:[#allocation3 + $0x8] sm:$0xff]
    %v47 = vld [vmem:[#allocation3 + $0x10] sm:$0xff]
    %v48 = vld [vmem:[#allocation3 + $0x18] sm:$0xff]
    %v49 = vmax.f32 %v45, 1e-06
    %v50 = vmax.f32 %v46, 1e-06
    %v51 = vmax.f32 %v47, 1e-06
    %v52 = vmax.f32 %v48, 1e-06
    %v53 = vld [vmem:[#allocation6] sm:$0xff]
    %v54 = vld [vmem:[#allocation6 + $0x8] sm:$0xff]
    %v55 = vld [vmem:[#allocation6 + $0x10] sm:$0xff]
    %v56 = vld [vmem:[#allocation6 + $0x18] sm:$0xff]
    %v57 = vmax.f32 %v53, 1e-06
    %v58 = vmax.f32 %v54, 1e-06
    %v59 = vmax.f32 %v55, 1e-06
    %v60 = vmax.f32 %v56, 1e-06
    %v61 = vadd.f32 %v49, 1.0
    %v62 = vlog2.pop %v61
    %v63 = vmul.f32 %v62, 0.6931472
    %v64 = vmul.f32 -0.5, %v49
    %v65 = vadd.f32 %v64, 1.0
    %v66 = vmul.f32 %v65, %v49
    %v67 = vand.u32 2147483647, %v49
    %vm68 = vcmp.lt.f32.partialorder %v67, 0.0004427343
    %v69 = vsel %vm68, %v66, %v63
    %v70 = vadd.f32 %v50, 1.0
    %v71 = vlog2.pop %v70
    %v72 = vmul.f32 %v71, 0.6931472
    %v73 = vmul.f32 -0.5, %v50
    %v74 = vadd.f32 %v73, 1.0
    %v75 = vmul.f32 %v74, %v50
    %v76 = vand.u32 2147483647, %v50
    %vm77 = vcmp.lt.f32.partialorder %v76, 0.0004427343
    %v78 = vsel %vm77, %v75, %v72
    %v79 = vadd.f32 %v51, 1.0
    %v80 = vlog2.pop %v79
    %v81 = vmul.f32 %v80, 0.6931472
    %v82 = vmul.f32 -0.5, %v51
    %v83 = vadd.f32 %v82, 1.0
    %v84 = vmul.f32 %v83, %v51
    %v85 = vand.u32 2147483647, %v51
    %vm86 = vcmp.lt.f32.partialorder %v85, 0.0004427343
    %v87 = vsel %vm86, %v84, %v81
    %v88 = vadd.f32 %v52, 1.0
    %v89 = vlog2.pop %v88
    %v90 = vmul.f32 %v89, 0.6931472
    %v91 = vmul.f32 -0.5, %v52
    %v92 = vadd.f32 %v91, 1.0
    %v93 = vmul.f32 %v92, %v52
    %v94 = vand.u32 2147483647, %v52
    %vm95 = vcmp.lt.f32.partialorder %v94, 0.0004427343
    %v96 = vsel %vm95, %v93, %v90
    %v97 = vadd.f32 %v57, 1.0
    %v98 = vlog2.pop %v97
    %v99 = vmul.f32 %v98, 0.6931472
    %v100 = vmul.f32 -0.5, %v57
    %v101 = vadd.f32 %v100, 1.0
    %v102 = vmul.f32 %v101, %v57
    %v103 = vand.u32 2147483647, %v57
    %vm104 = vcmp.lt.f32.partialorder %v103, 0.0004427343
    %v105 = vsel %vm104, %v102, %v99
    %v106 = vadd.f32 %v58, 1.0
    %v107 = vlog2.pop %v106
    %v108 = vmul.f32 %v107, 0.6931472
    %v109 = vmul.f32 -0.5, %v58
    %v110 = vadd.f32 %v109, 1.0
    %v111 = vmul.f32 %v110, %v58
    %v112 = vand.u32 2147483647, %v58
    %vm113 = vcmp.lt.f32.partialorder %v112, 0.0004427343
    %v114 = vsel %vm113, %v111, %v108
    %v115 = vadd.f32 %v59, 1.0
    %v116 = vlog2.pop %v115
    %v117 = vmul.f32 %v116, 0.6931472
    %v118 = vmul.f32 -0.5, %v59
    %v119 = vadd.f32 %v118, 1.0
    %v120 = vmul.f32 %v119, %v59
    %v121 = vand.u32 2147483647, %v59
    %vm122 = vcmp.lt.f32.partialorder %v121, 0.0004427343
    %v123 = vsel %vm122, %v120, %v117
    %v124 = vadd.f32 %v60, 1.0
    %v125 = vlog2.pop %v124
    %v126 = vmul.f32 %v125, 0.6931472
    %v127 = vmul.f32 -0.5, %v60
    %v128 = vadd.f32 %v127, 1.0
    %v129 = vmul.f32 %v128, %v60
    %v130 = vand.u32 2147483647, %v60
    %vm131 = vcmp.lt.f32.partialorder %v130, 0.0004427343
    %v132 = vsel %vm131, %v129, %v126
    %v133 = vsub.f32 %v69, %v105
    %v134 = vsub.f32 %v78, %v114
    %v135 = vsub.f32 %v87, %v123
    %v136 = vsub.f32 %v96, %v132
    %v137 = vmul.f32 %v133, %v133
    %v138 = vmul.f32 %v134, %v134
    %v139 = vmul.f32 %v135, %v135
    %v140 = vmul.f32 %v136, %v136
    %v141 = vld [vmem:[#allocation2] sm:$0xff]
    %v142 = vadd.f32 %v137, %v138
    %v143 = vadd.f32 %v142, %v139
    %v144 = vadd.f32 %v143, %v140
    %v145 = vadd.f32 %v141, %v144
    %146 = vst [vmem:[#allocation2] sm:$0xff] %v145
    // Predicated region
    $region22: #{rmsle_loss.1} parent=1 // pred_check
      %p147 = pneg %p40
    $region23: #{rmsle_loss.1} parent=1 // pred_check_branch
      %149 = sbr.rel (%p147) target = $region25
    $region24: #{rmsle_loss.1} parent=1 // pred_region
      %v150 = vld [vmem:[#allocation2] sm:$0xff]
      %151 = vadd.xlane.f32.xlu0 %v150
      %v152 = vpop.xlane.xlu0 %151
      %v153 = vrot.slane %v152, 4
      %v154 = vadd.f32 %v152, %v153
      %v155 = vrot.slane %v154, 2
      %v156 = vadd.f32 %v154, %v155
      %v157 = vrot.slane %v156, 1
      %v158 = vadd.f32 %v156, %v157
      %s159 = vtos %v158
      %s160 = scalar_lea.smem [#allocation8], 0
      %161 = sst [smem:[%s160]] %s159
    $region25: #{rmsle_loss.1} parent=1 // pred_fallthru
      _
    // Predicated region
    $region26: #{rmsle_loss.1} parent=1 // pred_check
      _
    $region27: #{rmsle_loss.1} parent=1 // pred_check_branch
      %163 = sbr.rel (0) target = $region29
    $region28: #{rmsle_loss.1} parent=1 // pred_region
      %s165 = ssub.s32 16, 16
      %166 = vsyncadd [#allocation5], %s165
      %169 = dma.smem_to_hbm [#allocation8], 16, %s2, [#allocation5]
    $region29: #{rmsle_loss.1} parent=1 // pred_fallthru
      _
    // Predicated region
    $region30: #{rmsle_loss.1} parent=1 // pred_check
      _
    $region31: #{rmsle_loss.1} parent=1 // pred_check_branch
      %171 = sbr.rel (0) target = $region33
    $region32: #{rmsle_loss.1} parent=1 // pred_region
      %172 = dma.done [#allocation5], 16
    $region33: #{rmsle_loss.1} parent=1 // pred_fallthru
      _
    %173 = sfence
    %174 = vsyncpa [#allocation4], 1
    %175 = vsyncpa [#allocation7], 1
    %176 = vsyncpa [#allocation5], 1

</llo_original>
